<compile_context>
chip_gen: v5e
topology: v5e:2x2
jax: 0.10.0
libtpu: 0.0.40
codegen_flags: <defaults>
</compile_context>

<pallas_src>
import numpy as np
import jax
import jax.numpy as jnp
from jax import lax
from jax.experimental import pallas as pl
from jax.experimental.pallas import tpu as pltpu


def _round_up(x, m):
    return ((x + m - 1) // m) * m


# ----------------------------------------------------------------------------
# Fused input projection (both directions, one pass over x), tiled over M.
# ----------------------------------------------------------------------------
def _proj_fused_kernel(x_ref, wf_ref, bf_ref, wb_ref, bb_ref, of_ref, ob_ref):
    x = x_ref[...]                                   # read x once, use twice
    of_ref[...] = (jnp.dot(x, wf_ref[...], preferred_element_type=jnp.float32)
                   + bf_ref[...])
    ob_ref[...] = (jnp.dot(x, wb_ref[...], preferred_element_type=jnp.float32)
                   + bb_ref[...])


def project_inputs(x_aug, wf, bf, wb, b_b, *, proj_dtype=jnp.float32, tm=256):
    """out_f = x_aug @ wf + bf ; out_b = x_aug @ wb + b_b (single x read)."""
    M, Fa = x_aug.shape
    Gf = wf.shape[1]
    Gb = wb.shape[1]
    tm_eff = tm if M > tm else _round_up(M, 16)      # 16: safe for bf16 sublanes
    Mp = _round_up(M, tm_eff)
    if Mp != M:
        x_aug = jnp.pad(x_aug, ((0, Mp - M), (0, 0)))
    xc = x_aug.astype(proj_dtype)
    wfc = wf.astype(proj_dtype)
    wbc = wb.astype(proj_dtype)
    of, ob = pl.pallas_call(
        _proj_fused_kernel,
        out_shape=(jax.ShapeDtypeStruct((Mp, Gf), jnp.float32),
                   jax.ShapeDtypeStruct((Mp, Gb), jnp.float32)),
        grid=(Mp // tm_eff,),
        in_specs=[pl.BlockSpec((tm_eff, Fa), lambda i: (i, 0)),
                  pl.BlockSpec((Fa, Gf), lambda i: (0, 0)),
                  pl.BlockSpec((1, Gf), lambda i: (0, 0)),
                  pl.BlockSpec((Fa, Gb), lambda i: (0, 0)),
                  pl.BlockSpec((1, Gb), lambda i: (0, 0))],
        out_specs=(pl.BlockSpec((tm_eff, Gf), lambda i: (i, 0)),
                   pl.BlockSpec((tm_eff, Gb), lambda i: (i, 0))),
        compiler_params=pltpu.CompilerParams(
            dimension_semantics=("parallel",)),
    )(xc, wfc, bf, wbc, b_b)
    return of[:M], ob[:M]


# ----------------------------------------------------------------------------
# Bidirectional tree recursion: one kernel, cross-tree batched per step.
# ----------------------------------------------------------------------------
def _bidir_tree_kernel(node_f_s, left_s, right_s, node_b_s, parent_s,  # SMEM (B*N,)
                       xpf_ref, xpb_ref, wl_ref, wr_ref, wh_ref,       # VMEM inputs
                       out_ref,                                        # (bb, N, 2h)
                       c_f, h_f, c_b, h_b,                             # (bb, N+2, h)
                       hl_s, hr_s, cl_s, cr_s, gf_s,                   # fwd staging
                       hp_s, cp_s, gb_s):                              # bwd staging
    bg = pl.program_id(0)
    bb, n_nodes, h2 = out_ref.shape
    h = h2 // 2

    # Fresh per-block state.  Row n_nodes = always-zero sentinel (missing
    # children / root parent); row n_nodes+1 = trash row for padded steps.
    c_f[...] = jnp.zeros_like(c_f)
    h_f[...] = jnp.zeros_like(h_f)
    c_b[...] = jnp.zeros_like(c_b)
    h_b[...] = jnp.zeros_like(h_b)

    base = bg * (bb * n_nodes)

    def step(t, carry):
        # ---- gather per-tree operands into staging (one row copy per tree) --
        for b in range(bb):                          # static; bb is small
            idx = base + b * n_nodes + t
            nf = node_f_s[idx]
            nf_g = jnp.minimum(nf, n_nodes - 1)      # clamp for padded steps
            li = left_s[idx]
            ri = right_s[idx]
            gf_s[pl.ds(b, 1), :] = xpf_ref[b, pl.ds(nf_g, 1), :]
            hl_s[pl.ds(b, 1), :] = h_f[b, pl.ds(li, 1), :]
            hr_s[pl.ds(b, 1), :] = h_f[b, pl.ds(ri, 1), :]
            cl_s[pl.ds(b, 1), :] = c_f[b, pl.ds(li, 1), :]
            cr_s[pl.ds(b, 1), :] = c_f[b, pl.ds(ri, 1), :]

            nb = node_b_s[idx]
            nb_g = jnp.minimum(nb, n_nodes - 1)
            pi = parent_s[idx]
            gb_s[pl.ds(b, 1), :] = xpb_ref[b, pl.ds(nb_g, 1), :]
            hp_s[pl.ds(b, 1), :] = h_b[b, pl.ds(pi, 1), :]
            cp_s[pl.ds(b, 1), :] = c_b[b, pl.ds(pi, 1), :]

        # ---- batched forward (leaves -> root) cell --------------------------
        # Weights are read from VMEM refs here (not pre-hoisted into vregs).
        g = (gf_s[...]
             + jnp.dot(hl_s[...], wl_ref[...], preferred_element_type=jnp.float32)
             + jnp.dot(hr_s[...], wr_ref[...], preferred_element_type=jnp.float32))
        i_g = jax.nn.sigmoid(g[:, 0 * h:1 * h])
        o_g = jax.nn.sigmoid(g[:, 1 * h:2 * h])
        fl_g = jax.nn.sigmoid(g[:, 2 * h:3 * h])
        fr_g = jax.nn.sigmoid(g[:, 3 * h:4 * h])
        u_g = jnp.tanh(g[:, 4 * h:5 * h])
        cf_new = i_g * u_g + fl_g * cl_s[...] + fr_g * cr_s[...]
        hf_new = o_g * jnp.tanh(cf_new)

        # ---- batched backward (root -> leaves) cell --------------------------
        gb = gb_s[...] + jnp.dot(hp_s[...], wh_ref[...],
                                 preferred_element_type=jnp.float32)
        ib = jax.nn.sigmoid(gb[:, 0 * h:1 * h])
        ob = jax.nn.sigmoid(gb[:, 1 * h:2 * h])
        fb = jax.nn.sigmoid(gb[:, 2 * h:3 * h])
        ub = jnp.tanh(gb[:, 3 * h:4 * h])
        cb_new = ib * ub + fb * cp_s[...]
        hb_new = ob * jnp.tanh(cb_new)

        # ---- scatter new state back (padded steps hit the trash row) --------
        for b in range(bb):
            idx = base + b * n_nodes + t
            nf = node_f_s[idx]
            nb = node_b_s[idx]
            c_f[b, pl.ds(nf, 1), :] = cf_new[b:b + 1, :]
            h_f[b, pl.ds(nf, 1), :] = hf_new[b:b + 1, :]
            c_b[b, pl.ds(nb, 1), :] = cb_new[b:b + 1, :]
            h_b[b, pl.ds(nb, 1), :] = hb_new[b:b + 1, :]
        return carry

    unroll = n_nodes if n_nodes <= 8 else 8          # bounded unroll for big N
    lax.fori_loop(0, n_nodes, step, 0, unroll=unroll)

    # Single bulk, lane-contiguous bidirectional store per tree block.
    out_ref[...] = jnp.concatenate(
        [h_f[...][:, :n_nodes, :], h_b[...][:, :n_nodes, :]], axis=2)


def bidirectional_tree_recursion(xproj_f, xproj_b, scheds, wl, wr, wh, *,
                                 b_block=None):
    B, N, G5 = xproj_f.shape
    G4 = xproj_b.shape[2]
    h = G5 // 5
    bb = B if b_block is None else b_block            # v7x: b_block=B//2 splits
    assert B % bb == 0                                # the blocks across 2 TCs
    grid_spec = pltpu.PrefetchScalarGridSpec(
        num_scalar_prefetch=5,
        grid=(B // bb,),
        in_specs=[
            pl.BlockSpec((bb, N, G5), lambda g, *_: (g, 0, 0)),
            pl.BlockSpec((bb, N, G4), lambda g, *_: (g, 0, 0)),
            pl.BlockSpec((h, G5), lambda g, *_: (0, 0)),
            pl.BlockSpec((h, G5), lambda g, *_: (0, 0)),
            pl.BlockSpec((h, G4), lambda g, *_: (0, 0)),
        ],
        out_specs=pl.BlockSpec((bb, N, 2 * h), lambda g, *_: (g, 0, 0)),
        scratch_shapes=[
            pltpu.VMEM((bb, N + 2, h), jnp.float32),   # c_f
            pltpu.VMEM((bb, N + 2, h), jnp.float32),   # h_f
            pltpu.VMEM((bb, N + 2, h), jnp.float32),   # c_b
            pltpu.VMEM((bb, N + 2, h), jnp.float32),   # h_b
            pltpu.VMEM((bb, h), jnp.float32),          # left h staging
            pltpu.VMEM((bb, h), jnp.float32),          # right h staging
            pltpu.VMEM((bb, h), jnp.float32),          # left c staging
            pltpu.VMEM((bb, h), jnp.float32),          # right c staging
            pltpu.VMEM((bb, G5), jnp.float32),         # fwd gate staging
            pltpu.VMEM((bb, h), jnp.float32),          # parent h staging
            pltpu.VMEM((bb, h), jnp.float32),          # parent c staging
            pltpu.VMEM((bb, G4), jnp.float32),         # bwd gate staging
        ],
    )
    return pl.pallas_call(
        _bidir_tree_kernel,
        out_shape=jax.ShapeDtypeStruct((B, N, 2 * h), jnp.float32),
        grid_spec=grid_spec,
        compiler_params=pltpu.CompilerParams(
            dimension_semantics=("parallel",)),
    )(*scheds, xproj_f, xproj_b, wl, wr, wh)


# ----------------------------------------------------------------------------
# Top-level forward
# ----------------------------------------------------------------------------
def bidirectional_tree_lstm(features, schedules, params_f, params_b, *,
                            proj_dtype=jnp.float32, b_block=None):
    # TODO(synk): training-mode dropout mask not implemented (dropout=0.0 path).
    B, N, F = features.shape
    (node_post, left_post, right_post, node_pre, parent_pre, has_l, has_r) = schedules
    wx_f, bx_f, wl_f, bl_f, wr_f, br_f = params_f
    wx_b, bx_b, wh_b, bh_b = params_b
    h = wl_f.shape[0]

    # Fold child-presence biases into the projection: augment x with the
    # has_left / has_right indicator columns and append bl / br as weight rows.
    x_aug = jnp.concatenate(
        [features.reshape(B * N, F),
         has_l.reshape(B * N, 1).astype(features.dtype),
         has_r.reshape(B * N, 1).astype(features.dtype)], axis=1)
    wf_aug = jnp.concatenate([wx_f, bl_f, br_f], axis=0)             # (F+2, 5h)
    wb_aug = jnp.concatenate(
        [wx_b, jnp.zeros((2, 4 * h), wx_b.dtype)], axis=0)           # (F+2, 4h)
    # The backward cell adds its recurrent bias unconditionally (also at the
    # root, where parent h == 0), matching the PyTorch module; fold into bx.
    b_b = bx_b + bh_b

    xproj_f, xproj_b = project_inputs(x_aug, wf_aug, bx_f, wb_aug, b_b,
                                      proj_dtype=proj_dtype)
    xproj_f = xproj_f.reshape(B, N, 5 * h)
    xproj_b = xproj_b.reshape(B, N, 4 * h)

    scheds = tuple(s.reshape(-1).astype(jnp.int32) for s in
                   (node_post, left_post, right_post, node_pre, parent_pre))
    return bidirectional_tree_recursion(xproj_f, xproj_b, scheds,
                                        wl_f, wr_f, wh_b, b_block=b_block)


# ----------------------------------------------------------------------------
# Host-side glue: tree linearization, pure-numpy reference
# ----------------------------------------------------------------------------
def build_schedules(left, right, root):
    """Linearize one tree into post-order (leaves->root) and pre-order
    (root->leaves) schedules of length n.

    Contract consumed by the kernel:
      * missing children / the root's parent map to zero-sentinel row n,
      * schedule steps that have no real node (trees with < n reachable nodes)
        come last, scatter into trash row n+1 and use the zero sentinel for
        their children / parent.
    """
    n = len(left)
    sentinel, trash = n, n + 1
    post, pre, parent_of = [], [], {}

    def post_rec(i):
        if left[i] >= 0:
            post_rec(left[i])
        if right[i] >= 0:
            post_rec(right[i])
        post.append(i)

    def pre_rec(i, p):
        pre.append(i)
        parent_of[i] = p
        if left[i] >= 0:
            pre_rec(left[i], i)
        if right[i] >= 0:
            pre_rec(right[i], i)

    post_rec(root)
    pre_rec(root, sentinel)
    pad = n - len(post)

    node_post = post + [trash] * pad
    left_post = [left[i] if left[i] >= 0 else sentinel for i in post] + [sentinel] * pad
    right_post = [right[i] if right[i] >= 0 else sentinel for i in post] + [sentinel] * pad
    node_pre = pre + [trash] * pad
    parent_pre = [parent_of[i] for i in pre] + [sentinel] * pad
    has_l = [1.0 if l >= 0 else 0.0 for l in left]
    has_r = [1.0 if r >= 0 else 0.0 for r in right]
    return (np.array(node_post, np.int32), np.array(left_post, np.int32),
            np.array(right_post, np.int32), np.array(node_pre, np.int32),
            np.array(parent_pre, np.int32), np.array(has_l, np.float32),
            np.array(has_r, np.float32))


def _sigmoid(x):
    return 1.0 / (1.0 + np.exp(-x))


def ref_fwd_tree(feats, left, right, root, wx, bx, wl, bl, wr, br, h):
    out = np.zeros((len(left), h), np.float32)

    def rec(n):
        if left[n] >= 0:
            lc, lh = rec(left[n]); has_l = True
        else:
            lc = np.zeros(h, np.float32); lh = np.zeros(h, np.float32); has_l = False
        if right[n] >= 0:
            rc, rh = rec(right[n]); has_r = True
        else:
            rc = np.zeros(h, np.float32); rh = np.zeros(h, np.float32); has_r = False
        g = feats[n] @ wx + bx[0]
        if has_l:
            g = g + lh @ wl + bl[0]
        if has_r:
            g = g + rh @ wr + br[0]
        i, o, fl, fr, u = g[:h], g[h:2*h], g[2*h:3*h], g[3*h:4*h], g[4*h:5*h]
        c = _sigmoid(i) * np.tanh(u) + _sigmoid(fl) * lc + _sigmoid(fr) * rc
        hh = _sigmoid(o) * np.tanh(c)
        out[n] = hh
        return c, hh

    rec(root)
    return out


def ref_bwd_tree(feats, left, right, root, wx, bx, wh, bh, h):
    out = np.zeros((len(left), h), np.float32)

    def rec(n, pc, ph):
        g = feats[n] @ wx + bx[0] + ph @ wh + bh[0]
        i, o, f, u = g[:h], g[h:2*h], g[2*h:3*h], g[3*h:4*h]
        c = _sigmoid(i) * np.tanh(u) + _sigmoid(f) * pc
        hh = _sigmoid(o) * np.tanh(c)
        out[n] = hh
        if left[n] >= 0:
            rec(left[n], c, hh)
        if right[n] >= 0:
            rec(right[n], c, hh)

    z = np.zeros(h, np.float32)
    rec(root, z, z)
    return out


if __name__ == "__main__":
    B, N = 2, 8            # two trees, num_obj = 8 node slots each
    in_dim = 64            # feat_dim
    out_dim = 64           # bidirectional output dim
    h_dim = out_dim // 2   # per-direction hidden dim

    key = jax.random.PRNGKey(0)
    keys = jax.random.split(key, 8)

    # --- deterministic parameter init (block_orthogonal -> scaled normal) ---
    wx_f = (0.1 * jax.random.normal(keys[0], (in_dim, 5 * h_dim))).astype(jnp.float32)
    wl_f = (0.1 * jax.random.normal(keys[1], (h_dim, 5 * h_dim))).astype(jnp.float32)
    wr_f = (0.1 * jax.random.normal(keys[2], (h_dim, 5 * h_dim))).astype(jnp.float32)
    bx_f = jnp.zeros((1, 5 * h_dim), jnp.float32)
    bl_f = jnp.zeros((1, 5 * h_dim), jnp.float32).at[:, 2 * h_dim:4 * h_dim].set(0.5)
    br_f = jnp.zeros((1, 5 * h_dim), jnp.float32).at[:, 2 * h_dim:4 * h_dim].set(0.5)
    wx_b = (0.1 * jax.random.normal(keys[3], (in_dim, 4 * h_dim))).astype(jnp.float32)
    wh_b = (0.1 * jax.random.normal(keys[4], (h_dim, 4 * h_dim))).astype(jnp.float32)
    bx_b = jnp.zeros((1, 4 * h_dim), jnp.float32)
    bh_b = jnp.zeros((1, 4 * h_dim), jnp.float32).at[:, 2 * h_dim:3 * h_dim].set(1.0)

    # tree 0: complete binary tree (8 nodes); tree 1: left chain over 6 of 8
    # nodes (exercises the padded-schedule / trash-row path).
    left0 = [1, 3, 5, 7, -1, -1, -1, -1]
    right0 = [2, 4, 6, -1, -1, -1, -1, -1]
    left1 = [1, 2, 3, 4, 5, -1, -1, -1]
    right1 = [-1] * 8
    trees = [(left0, right0, 0), (left1, right1, 0)]

    node_post = np.zeros((B, N), np.int32)
    left_post = np.zeros((B, N), np.int32)
    right_post = np.zeros((B, N), np.int32)
    node_pre = np.zeros((B, N), np.int32)
    parent_pre = np.zeros((B, N), np.int32)
    has_l = np.zeros((B, N), np.float32)
    has_r = np.zeros((B, N), np.float32)
    for b, (lt, rt, root) in enumerate(trees):
        np_, lp_, rp_, npre_, ppre_, hl_, hr_ = build_schedules(lt, rt, root)
        node_post[b], left_post[b], right_post[b] = np_, lp_, rp_
        node_pre[b], parent_pre[b] = npre_, ppre_
        has_l[b], has_r[b] = hl_, hr_

    features = jax.random.normal(keys[5], (B, N, in_dim), jnp.float32)

    schedules = (jnp.asarray(node_post), jnp.asarray(left_post),
                 jnp.asarray(right_post), jnp.asarray(node_pre),
                 jnp.asarray(parent_pre), jnp.asarray(has_l), jnp.asarray(has_r))
    params_f = (wx_f, bx_f, wl_f, bl_f, wr_f, br_f)
    params_b = (wx_b, bx_b, wh_b, bh_b)

    # --- f32 projection path: strict check against the numpy reference ---
    out32 = bidirectional_tree_lstm(features, schedules, params_f, params_b,
                                    proj_dtype=jnp.float32)
    out32 = jax.block_until_ready(out32)
    assert out32.shape == (B, N, out_dim)

    feats_np = np.asarray(features)
    ref = np.zeros((B, N, out_dim), np.float32)
    for b, (lt, rt, root) in enumerate(trees):
        ref[b, :, :h_dim] = ref_fwd_tree(
            feats_np[b], lt, rt, root,
            np.asarray(wx_f), np.asarray(bx_f), np.asarray(wl_f), np.asarray(bl_f),
            np.asarray(wr_f), np.asarray(br_f), h_dim)
        ref[b, :, h_dim:] = ref_bwd_tree(
            feats_np[b], lt, rt, root,
            np.asarray(wx_b), np.asarray(bx_b), np.asarray(wh_b), np.asarray(bh_b),
            h_dim)
    np.testing.assert_allclose(np.asarray(out32), ref, rtol=2e-3, atol=2e-3)

    # --- bf16 projection path (v6e/v7x MXU): f32 accumulation, f32 recurrence ---
    out16 = bidirectional_tree_lstm(features, schedules, params_f, params_b,
                                    proj_dtype=jnp.bfloat16)
    out16 = jax.block_until_ready(out16)
    np.testing.assert_allclose(np.asarray(out16), np.asarray(out32),
                               rtol=2e-2, atol=2e-2)

    print("KERNEL_OK")
</pallas_src>

<mosaic_0001>
module attributes {stable_mosaic.version = 11 : i64} {
  func.func @_proj_fused_kernel(%arg0: i32, %arg1: memref<16x66xf32, #tpu.memory_space<vmem>>, %arg2: memref<66x160xf32, #tpu.memory_space<vmem>>, %arg3: memref<1x160xf32, #tpu.memory_space<vmem>>, %arg4: memref<66x128xf32, #tpu.memory_space<vmem>>, %arg5: memref<1x128xf32, #tpu.memory_space<vmem>>, %arg6: memref<16x160xf32, #tpu.memory_space<vmem>>, %arg7: memref<16x128xf32, #tpu.memory_space<vmem>>) attributes {dimension_semantics = [#tpu.dimension_semantics<parallel>], iteration_bounds = array<i64: 1>, scalar_prefetch = 0 : i64, scratch_operands = 0 : i64, tpu.core_type = #tpu.core_type<tc>, window_params = [{transform_indices = @transform_0, window_bounds = array<i64: 16, 66>}, {pipeline_mode = #tpu.pipeline_mode<synchronous>, transform_indices = @transform_1, window_bounds = array<i64: 66, 160>}, {pipeline_mode = #tpu.pipeline_mode<synchronous>, transform_indices = @transform_2, window_bounds = array<i64: 1, 160>}, {pipeline_mode = #tpu.pipeline_mode<synchronous>, transform_indices = @transform_3, window_bounds = array<i64: 66, 128>}, {pipeline_mode = #tpu.pipeline_mode<synchronous>, transform_indices = @transform_4, window_bounds = array<i64: 1, 128>}, {transform_indices = @transform_5, window_bounds = array<i64: 16, 160>}, {transform_indices = @transform_6, window_bounds = array<i64: 16, 128>}]} {
    %c0 = arith.constant 0 : index
    %c0_0 = arith.constant 0 : index
    %0 = vector.load %arg1[%c0, %c0_0] : memref<16x66xf32, #tpu.memory_space<vmem>>, vector<16x66xf32>
    %c0_1 = arith.constant 0 : index
    %c0_2 = arith.constant 0 : index
    %1 = vector.load %arg2[%c0_1, %c0_2] : memref<66x160xf32, #tpu.memory_space<vmem>>, vector<66x160xf32>
    %cst = arith.constant dense<0.000000e+00> : vector<16x160xf32>
    %2 = tpu.matmul %0, %1, %cst {dimension_numbers = #tpu.dot_dimension_numbers<[1], [0], [0], [1], [0, 0, 1, 1], [], []>} : vector<16x66xf32>, vector<66x160xf32>, vector<16x160xf32> -> vector<16x160xf32>
    %c0_3 = arith.constant 0 : index
    %c0_4 = arith.constant 0 : index
    %3 = vector.load %arg3[%c0_3, %c0_4] : memref<1x160xf32, #tpu.memory_space<vmem>>, vector<1x160xf32>
    %4 = vector.broadcast %3 : vector<1x160xf32> to vector<16x160xf32>
    %5 = arith.addf %2, %4 : vector<16x160xf32>
    %c0_5 = arith.constant 0 : index
    %c0_6 = arith.constant 0 : index
    %6 = vector.load %arg6[%c0_5, %c0_6] : memref<16x160xf32, #tpu.memory_space<vmem>>, vector<16x160xf32>
    tpu.vector_store %arg6[%c0_5, %c0_6], %5 {strides = array<i32>} : memref<16x160xf32, #tpu.memory_space<vmem>>, vector<16x160xf32>,
    %c0_7 = arith.constant 0 : index
    %c0_8 = arith.constant 0 : index
    %7 = vector.load %arg4[%c0_7, %c0_8] : memref<66x128xf32, #tpu.memory_space<vmem>>, vector<66x128xf32>
    %cst_9 = arith.constant dense<0.000000e+00> : vector<16x128xf32>
    %8 = tpu.matmul %0, %7, %cst_9 {dimension_numbers = #tpu.dot_dimension_numbers<[1], [0], [0], [1], [0, 0, 1, 1], [], []>} : vector<16x66xf32>, vector<66x128xf32>, vector<16x128xf32> -> vector<16x128xf32>
    %c0_10 = arith.constant 0 : index
    %c0_11 = arith.constant 0 : index
    %9 = vector.load %arg5[%c0_10, %c0_11] : memref<1x128xf32, #tpu.memory_space<vmem>>, vector<1x128xf32>
    %10 = vector.broadcast %9 : vector<1x128xf32> to vector<16x128xf32>
    %11 = arith.addf %8, %10 : vector<16x128xf32>
    %c0_12 = arith.constant 0 : index
    %c0_13 = arith.constant 0 : index
    %12 = vector.load %arg7[%c0_12, %c0_13] : memref<16x128xf32, #tpu.memory_space<vmem>>, vector<16x128xf32>
    tpu.vector_store %arg7[%c0_12, %c0_13], %11 {strides = array<i32>} : memref<16x128xf32, #tpu.memory_space<vmem>>, vector<16x128xf32>,
    return
  }
  func.func @transform_0(%arg0: i32) -> (i32, i32) {
    %c0_i32 = arith.constant 0 : i32
    %c0_i32_0 = arith.constant 0 : i32
    return %arg0, %c0_i32 : i32, i32
  }
  func.func @transform_1(%arg0: i32) -> (i32, i32) {
    %c0_i32 = arith.constant 0 : i32
    %c0_i32_0 = arith.constant 0 : i32
    %c0_i32_1 = arith.constant 0 : i32
    return %c0_i32, %c0_i32_0 : i32, i32
  }
  func.func @transform_2(%arg0: i32) -> (i32, i32) {
    %c0_i32 = arith.constant 0 : i32
    %c0_i32_0 = arith.constant 0 : i32
    %c0_i32_1 = arith.constant 0 : i32
    return %c0_i32, %c0_i32_0 : i32, i32
  }
  func.func @transform_3(%arg0: i32) -> (i32, i32) {
    %c0_i32 = arith.constant 0 : i32
    %c0_i32_0 = arith.constant 0 : i32
    %c0_i32_1 = arith.constant 0 : i32
    return %c0_i32, %c0_i32_0 : i32, i32
  }
  func.func @transform_4(%arg0: i32) -> (i32, i32) {
    %c0_i32 = arith.constant 0 : i32
    %c0_i32_0 = arith.constant 0 : i32
    %c0_i32_1 = arith.constant 0 : i32
    return %c0_i32, %c0_i32_0 : i32, i32
  }
  func.func @transform_5(%arg0: i32) -> (i32, i32) {
    %c0_i32 = arith.constant 0 : i32
    %c0_i32_0 = arith.constant 0 : i32
    return %arg0, %c0_i32 : i32, i32
  }
  func.func @transform_6(%arg0: i32) -> (i32, i32) {
    %c0_i32 = arith.constant 0 : i32
    %c0_i32_0 = arith.constant 0 : i32
    return %arg0, %c0_i32 : i32, i32
  }
}

</mosaic_0001>

<llo_original>
// kernel: tpu_custom_call.1
$region0: #{tpu_custom_call.1}
  #allocation0 [shape = 'u32[]', space=smem, size = 0x4, offset = 0x4, fixed_abs, tag = 'smem constant byte address 0x4 - core index']
  #allocation1 [shape = 'u32[72,128]{1,0:T(1,128)}', space=vmem, size = 0x9000, scoped, tag = 'internal scratch']
  %s0 = inlined_call_operand.hbm [shape: f32[16,66], index: 0, kind: input, shape index: {}]
  %s1 = inlined_call_operand.hbm [shape: f32[66,160], index: 1, kind: input, shape index: {}]
  %s2 = inlined_call_operand.hbm [shape: f32[1,160], index: 2, kind: input, shape index: {}]
  %s3 = inlined_call_operand.hbm [shape: f32[66,128], index: 3, kind: input, shape index: {}]
  %s4 = inlined_call_operand.vmem [shape: f32[1,128], index: 4, kind: input, shape index: {}]
  %s5 = inlined_call_operand.hbm [shape: f32[16,160], index: 5, kind: output, shape index: {0}]
  %s6 = inlined_call_operand.hbm [shape: f32[16,128], index: 6, kind: output, shape index: {1}]
  %7 = xla_tuple %s5, %s6
  %s8 = sld [smem:[#allocation0]]
  $region54: #{tpu_custom_call.1} parent=0
    _
  %s10 = ssub.s32 1, %s8
  %s11 = scalar_select 0, %s10, %s8
  $region1: #{tpu_custom_call.1} parent=0
    #allocation2 [shape = 'u8[8192]{0}', space=vmem, size = 0x2000, scoped, tag = 'input window, operand 0, single buffered']
    #allocation3 [shape = 's32[1]{0}', space=sflag, size = 0x4, scoped, tag = 'scoped memory for tpu_custom_call.1']
    #allocation4 [shape = 's32[1]{0}', space=sflag, size = 0x4, scoped, tag = 'scoped memory for tpu_custom_call.1']
    #allocation5 [shape = 'u8[73728]{0}', space=vmem, size = 0x12000, scoped, tag = 'input window, operand 1, single buffered']
    #allocation6 [shape = 's32[1]{0}', space=sflag, size = 0x4, scoped, tag = 'scoped memory for tpu_custom_call.1']
    #allocation7 [shape = 'u8[1024]{0}', space=vmem, size = 0x400, scoped, tag = 'input window, operand 2, single buffered']
    #allocation8 [shape = 'u8[36864]{0}', space=vmem, size = 0x9000, scoped, tag = 'input window, operand 3, single buffered']
    #allocation9 [shape = 's32[1]{0}', space=sflag, size = 0x4, scoped, tag = 'scoped memory for tpu_custom_call.1']
    #allocation10 [shape = 'u8[16384]{0}', space=vmem, size = 0x4000, scoped, tag = 'output window, operand 0, single buffered']
    #allocation11 [shape = 'u8[8192]{0}', space=vmem, size = 0x2000, scoped, tag = 'output window, operand 1, single buffered']
    #allocation12 [shape = 's32[1]{0}', space=sflag, size = 0x4, scoped, tag = 'scoped memory for tpu_custom_call.1']
    %12 = vsyncpa [#allocation3], 0
    %13 = vsyncpa [#allocation6], 0
    %14 = vsyncpa [#allocation9], 0
    %15 = vsyncpa [#allocation4], 0
    %16 = vsyncpa [#allocation12], 0
    // Predicated region
    $region2: #{tpu_custom_call.1} parent=1 // pred_check
      _
    $region3: #{tpu_custom_call.1} parent=1 // pred_check_branch
      %18 = sbr.rel (0) target = $region5
    $region4: #{tpu_custom_call.1} parent=1 // pred_region
      %20 = vsyncadd [#allocation3], 0
      %s21 = sshll.u32 %s0, 4
      %s22 = int_to_ptr.hbm [resolvable:$true] %s21
      %s23 = sshll.u32 [#allocation2], 4
      %s24 = int_to_ptr.vmem [resolvable:$true] %s23
      %29 = dma.hbm_to_vmem [thread:$0]  %s22, 256, %s24, [#allocation3], 128, 128, 8
    $region5: #{tpu_custom_call.1} parent=1 // pred_fallthru
      _
    // Predicated region
    $region6: #{tpu_custom_call.1} parent=1 // pred_check
      _
    $region7: #{tpu_custom_call.1} parent=1 // pred_check_branch
      %31 = sbr.rel (0) target = $region9
    $region8: #{tpu_custom_call.1} parent=1 // pred_region
      %33 = vsyncadd [#allocation6], 0
      %s34 = sshll.u32 %s1, 4
      %s35 = int_to_ptr.hbm [resolvable:$true] %s34
      %s36 = sshll.u32 [#allocation5], 4
      %s37 = int_to_ptr.vmem [resolvable:$true] %s36
      %42 = dma.hbm_to_vmem [thread:$0]  %s35, 2304, %s37, [#allocation6], 256, 256, 16
    $region9: #{tpu_custom_call.1} parent=1 // pred_fallthru
      _
    // Predicated region
    $region10: #{tpu_custom_call.1} parent=1 // pred_check
      _
    $region11: #{tpu_custom_call.1} parent=1 // pred_check_branch
      %44 = sbr.rel (0) target = $region13
    $region12: #{tpu_custom_call.1} parent=1 // pred_region
      %46 = vsyncadd [#allocation6], 0
      %s48 = sshll.u32 %s2, 4
      %s49 = int_to_ptr.hbm [resolvable:$true] %s48
      %s50 = sshll.u32 [#allocation7], 4
      %s51 = int_to_ptr.vmem [resolvable:$true] %s50
      %53 = dma.hbm_to_vmem [thread:$0]  %s49, 32, %s51, [#allocation6]
    $region13: #{tpu_custom_call.1} parent=1 // pred_fallthru
      _
    // Predicated region
    $region14: #{tpu_custom_call.1} parent=1 // pred_check
      _
    $region15: #{tpu_custom_call.1} parent=1 // pred_check_branch
      %55 = sbr.rel (0) target = $region17
    $region16: #{tpu_custom_call.1} parent=1 // pred_region
      %57 = vsyncadd [#allocation9], 0
      %s58 = sshll.u32 %s3, 4
      %s59 = int_to_ptr.hbm [resolvable:$true] %s58
      %s60 = sshll.u32 [#allocation8], 4
      %s61 = int_to_ptr.vmem [resolvable:$true] %s60
      %66 = dma.hbm_to_vmem [thread:$0]  %s59, 1152, %s61, [#allocation9], 128, 128, 8
    $region17: #{tpu_custom_call.1} parent=1 // pred_fallthru
      _
    // Predicated region
    $region18: #{tpu_custom_call.1} parent=1 // pred_check
      _
    $region19: #{tpu_custom_call.1} parent=1 // pred_check_branch
      %68 = sbr.rel (0) target = $region21
    $region20: #{tpu_custom_call.1} parent=1 // pred_region
      _
    $region21: #{tpu_custom_call.1} parent=1 // pred_fallthru
      _
    // Predicated region
    $region22: #{tpu_custom_call.1} parent=1 // pred_check
      _
    $region23: #{tpu_custom_call.1} parent=1 // pred_check_branch
      %70 = sbr.rel (0) target = $region25
    $region24: #{tpu_custom_call.1} parent=1 // pred_region
      %72 = dma.done [#allocation3], 256
    $region25: #{tpu_custom_call.1} parent=1 // pred_fallthru
      _
    // Predicated region
    $region26: #{tpu_custom_call.1} parent=1 // pred_check
      _
    $region27: #{tpu_custom_call.1} parent=1 // pred_check_branch
      %74 = sbr.rel (0) target = $region29
    $region28: #{tpu_custom_call.1} parent=1 // pred_region
      %76 = dma.done [#allocation6], 2304
    $region29: #{tpu_custom_call.1} parent=1 // pred_fallthru
      _
    // Predicated region
    $region30: #{tpu_custom_call.1} parent=1 // pred_check
      _
    $region31: #{tpu_custom_call.1} parent=1 // pred_check_branch
      %78 = sbr.rel (0) target = $region33
    $region32: #{tpu_custom_call.1} parent=1 // pred_region
      %80 = dma.done [#allocation6], 32
    $region33: #{tpu_custom_call.1} parent=1 // pred_fallthru
      _
    // Predicated region
    $region34: #{tpu_custom_call.1} parent=1 // pred_check
      _
    $region35: #{tpu_custom_call.1} parent=1 // pred_check_branch
      %82 = sbr.rel (0) target = $region37
    $region36: #{tpu_custom_call.1} parent=1 // pred_region
      %84 = dma.done [#allocation9], 1152
    $region37: #{tpu_custom_call.1} parent=1 // pred_fallthru
      _
    %v85 = vld [vmem:[#allocation2] sm:$0xff]
    %v86 = vld [vmem:[#allocation2 + $0x8] sm:$0xff]
    %v87 = vld [vmem:[#allocation5] sm:$0xff]
    %v88 = vld [vmem:[#allocation5 + $0x8] sm:$0xff]
    %v89 = vld [vmem:[#allocation5 + $0x10] sm:$0xff]
    %v90 = vld [vmem:[#allocation5 + $0x18] sm:$0xff]
    %v91 = vld [vmem:[#allocation5 + $0x20] sm:$0xff]
    %v92 = vld [vmem:[#allocation5 + $0x28] sm:$0xff]
    %v93 = vld [vmem:[#allocation5 + $0x30] sm:$0xff]
    %v94 = vld [vmem:[#allocation5 + $0x38] sm:$0xff]
    %v95 = vld [vmem:[#allocation5 + $0x40] sm:$0xff]
    %v96 = vld [vmem:[#allocation5 + $0x48] sm:$0xff]
    %v97 = vld [vmem:[#allocation5 + $0x50] sm:$0xff]
    %v98 = vld [vmem:[#allocation5 + $0x58] sm:$0xff]
    %v99 = vld [vmem:[#allocation5 + $0x60] sm:$0xff]
    %v100 = vld [vmem:[#allocation5 + $0x68] sm:$0xff]
    %v101 = vld [vmem:[#allocation5 + $0x70] sm:$0xff]
    %v102 = vld [vmem:[#allocation5 + $0x78] sm:$0xff]
    %v103 = vld [vmem:[#allocation5 + $0x80] sm:$0x3]
    %v104 = vld [vmem:[#allocation5 + $0x88] sm:$0x3]
    %v105 = vld [vmem:[#allocation7] sm:$0x3]
    %v107 = vperm.slane %v105, 0
    %v108 = vperm.slane %v105, 1
    %vm111 = vcmask 539648
    %v113 = vsel %vm111, %v85, 0
    %v116 = vsel %vm111, %v86, 0
    %vm118 = vcmask 1041408
    %v120 = vsel %vm118, %v103, 0
    %v123 = vsel %vm118, %v104, 0
    %125 = vmatpush.msra.mxu0 0.0
    %126 = vmatpush.msra.mxu0 0.0
    %127 = vmatpush.msra.mxu0 0.0
    %128 = vmatpush.msra.mxu0 0.0
    %129 = vmatpush.msra.mxu0 0.0
    %130 = vmatpush.msra.mxu0 0.0
    %131 = vmatpush.msra.mxu0 0.0
    %132 = vmatpush.msra.mxu0 %v120
    %133 = vmatpush.msra.mxu0 %v101
    %134 = vmatpush.msra.mxu0 %v99
    %135 = vmatpush.msra.mxu0 %v97
    %136 = vmatpush.msra.mxu0 %v95
    %137 = vmatpush.msra.mxu0 %v93
    %138 = vmatpush.msra.mxu0 %v91
    %139 = vmatpush.msra.mxu0 %v89
    %140 = vmatpush.msra.mxu0 %v87
    %141 = vmatmul.f32.gmra.mxu0 %v113
    %v142 = vpop.f32.mrf.mxu0
    %v143 = vadd.f32 %v107, %v142
    %144 = vmatmul.f32.gmra.mxu0 %v116
    %v145 = vpop.f32.mrf.mxu0
    %v146 = vadd.f32 %v107, %v145
    %147 = vdwg.mxu0
    %148 = vmatpush.msra.mxu0 0.0
    %149 = vmatpush.msra.mxu0 0.0
    %150 = vmatpush.msra.mxu0 0.0
    %151 = vmatpush.msra.mxu0 0.0
    %152 = vmatpush.msra.mxu0 0.0
    %153 = vmatpush.msra.mxu0 0.0
    %154 = vmatpush.msra.mxu0 0.0
    %155 = vmatpush.msra.mxu0 %v123
    %156 = vmatpush.msra.mxu0 %v102
    %157 = vmatpush.msra.mxu0 %v100
    %158 = vmatpush.msra.mxu0 %v98
    %159 = vmatpush.msra.mxu0 %v96
    %160 = vmatpush.msra.mxu0 %v94
    %161 = vmatpush.msra.mxu0 %v92
    %162 = vmatpush.msra.mxu0 %v90
    %163 = vmatpush.msra.mxu0 %v88
    %164 = vmatmul.f32.gmra.mxu0 %v113
    %v165 = vpop.f32.mrf.mxu0
    %v166 = vadd.f32 %v108, %v165
    %167 = vmatmul.f32.gmra.mxu0 %v116
    %v168 = vpop.f32.mrf.mxu0
    %v169 = vadd.f32 %v108, %v168
    %170 = vdwg.mxu0
    %171 = vst [vmem:[#allocation10] sm:$0xff] %v143
    %vm172 = vcmask 261120
    %173 = vst.msk [vmem:[#allocation10 + $0x8] sm:$0xff] %vm172, %v166
    %174 = vst [vmem:[#allocation10 + $0x10] sm:$0xff] %v146
    %175 = vst.msk [vmem:[#allocation10 + $0x18] sm:$0xff] %vm172, %v169
    %v176 = vld [vmem:[#allocation8] sm:$0xff]
    %v177 = vld [vmem:[#allocation8 + $0x8] sm:$0xff]
    %v178 = vld [vmem:[#allocation8 + $0x10] sm:$0xff]
    %v179 = vld [vmem:[#allocation8 + $0x18] sm:$0xff]
    %v180 = vld [vmem:[#allocation8 + $0x20] sm:$0xff]
    %v181 = vld [vmem:[#allocation8 + $0x28] sm:$0xff]
    %v182 = vld [vmem:[#allocation8 + $0x30] sm:$0xff]
    %v183 = vld [vmem:[#allocation8 + $0x38] sm:$0xff]
    %v184 = vld [vmem:[#allocation8 + $0x40] sm:$0x3]
    %v185 = vld [vmem:[%s4] sm:$0x1]
    %v187 = vperm.slane %v185, 0
    %v190 = vsel %vm118, %v184, 0
    %192 = vmatpush.msra.mxu0 0.0
    %193 = vmatpush.msra.mxu0 0.0
    %194 = vmatpush.msra.mxu0 0.0
    %195 = vmatpush.msra.mxu0 0.0
    %196 = vmatpush.msra.mxu0 0.0
    %197 = vmatpush.msra.mxu0 0.0
    %198 = vmatpush.msra.mxu0 0.0
    %199 = vmatpush.msra.mxu0 %v190
    %200 = vmatpush.msra.mxu0 %v183
    %201 = vmatpush.msra.mxu0 %v182
    %202 = vmatpush.msra.mxu0 %v181
    %203 = vmatpush.msra.mxu0 %v180
    %204 = vmatpush.msra.mxu0 %v179
    %205 = vmatpush.msra.mxu0 %v178
    %206 = vmatpush.msra.mxu0 %v177
    %207 = vmatpush.msra.mxu0 %v176
    %208 = vmatmul.f32.gmra.mxu0 %v113
    %v209 = vpop.f32.mrf.mxu0
    %v210 = vadd.f32 %v187, %v209
    %211 = vmatmul.f32.gmra.mxu0 %v116
    %v212 = vpop.f32.mrf.mxu0
    %v213 = vadd.f32 %v187, %v212
    %214 = vdwg.mxu0
    %215 = vst [vmem:[#allocation11] sm:$0xff] %v210
    %216 = vst [vmem:[#allocation11 + $0x8] sm:$0xff] %v213
    // Predicated region
    $region38: #{tpu_custom_call.1} parent=1 // pred_check
      _
    $region39: #{tpu_custom_call.1} parent=1 // pred_check_branch
      %218 = sbr.rel (0) target = $region41
    $region40: #{tpu_custom_call.1} parent=1 // pred_region
      %220 = vsyncadd [#allocation4], 0
      %s221 = sshll.u32 [#allocation10], 4
      %s222 = int_to_ptr.vmem [resolvable:$true] %s221
      %s223 = sshll.u32 %s5, 4
      %s224 = int_to_ptr.hbm [resolvable:$true] %s223
      %229 = dma.vmem_to_hbm [thread:$0]  %s222, 512, %s224, [#allocation4], 256, 256, 16
    $region41: #{tpu_custom_call.1} parent=1 // pred_fallthru
      _
    // Predicated region
    $region42: #{tpu_custom_call.1} parent=1 // pred_check
      _
    $region43: #{tpu_custom_call.1} parent=1 // pred_check_branch
      %231 = sbr.rel (0) target = $region45
    $region44: #{tpu_custom_call.1} parent=1 // pred_region
      %233 = vsyncadd [#allocation12], 0
      %s234 = sshll.u32 [#allocation11], 4
      %s235 = int_to_ptr.vmem [resolvable:$true] %s234
      %s236 = sshll.u32 %s6, 4
      %s237 = int_to_ptr.hbm [resolvable:$true] %s236
      %242 = dma.vmem_to_hbm [thread:$0]  %s235, 256, %s237, [#allocation12], 128, 128, 8
    $region45: #{tpu_custom_call.1} parent=1 // pred_fallthru
      _
    // Predicated region
    $region46: #{tpu_custom_call.1} parent=1 // pred_check
      _
    $region47: #{tpu_custom_call.1} parent=1 // pred_check_branch
      %244 = sbr.rel (0) target = $region49
    $region48: #{tpu_custom_call.1} parent=1 // pred_region
      %246 = dma.done [#allocation4], 512
    $region49: #{tpu_custom_call.1} parent=1 // pred_fallthru
      _
    // Predicated region
    $region50: #{tpu_custom_call.1} parent=1 // pred_check
      _
    $region51: #{tpu_custom_call.1} parent=1 // pred_check_branch
      %248 = sbr.rel (0) target = $region53
    $region52: #{tpu_custom_call.1} parent=1 // pred_region
      %250 = dma.done [#allocation12], 256
    $region53: #{tpu_custom_call.1} parent=1 // pred_fallthru
      _
    %251 = vsyncpa [#allocation3], 1
    %252 = vsyncpa [#allocation6], 1
    %253 = vsyncpa [#allocation9], 1
    %254 = vsyncpa [#allocation4], 1
    %255 = vsyncpa [#allocation12], 1

</llo_original>
